<compile_context>
chip_gen: v7x
topology: tpu7x:2x2x1
jax: 0.10.0
libtpu: 0.0.40
codegen_flags: <defaults>
</compile_context>

<pallas_src>
import functools

import jax
import jax.numpy as jnp
from jax.experimental import pallas as pl
from jax.experimental.pallas import tpu as pltpu

LN_EPS = 1e-5  # nn.LayerNorm default eps


def _round_up(n, m):
    return (n + m - 1) // m * m


def ffn_kernel(x_ref, w1_ref, b1_ref, w2_ref, b2_ref, g_ref, beta_ref, o_ref,
               *, d_valid, d_padded):
    # x_ref: (tm, Dp)         w1_ref: (Dp, Hp) bf16   b1_ref: (1, Hp) f32
    # w2_ref: (Hp, Dp) bf16   b2_ref / g_ref / beta_ref: (1, Dp) f32
    x = x_ref[...]
    x_f32 = x.astype(jnp.float32)      # residual / LayerNorm path (VPU, f32)
    x_bf16 = x.astype(jnp.bfloat16)    # MXU operand

    # fc1 (bf16 MXU, f32 accumulation) + bias + ReLU
    h = jnp.dot(x_bf16, w1_ref[...], preferred_element_type=jnp.float32)
    h = jnp.maximum(h + b1_ref[...], 0.0)

    # fc2 (bf16 MXU, f32 accumulation) + bias; dropout(p=0) identity; residual
    y = jnp.dot(h.astype(jnp.bfloat16), w2_ref[...],
                preferred_element_type=jnp.float32)
    y = y + b2_ref[...] + x_f32

    # LayerNorm over the true feature width d_valid.  Padded feature columns of
    # y are exactly zero (zero-padded x / weights / biases), so the row sum is
    # already exact; only the centered values need masking for the variance.
    inv_d = 1.0 / float(d_valid)
    mean = jnp.sum(y, axis=-1, keepdims=True) * inv_d
    centered = y - mean
    if d_padded != d_valid:
        col = jax.lax.broadcasted_iota(jnp.int32, y.shape, 1)
        centered = jnp.where(col < d_valid, centered, 0.0)
    var = jnp.sum(centered * centered, axis=-1, keepdims=True) * inv_d
    out = centered * jax.lax.rsqrt(var + LN_EPS)       # rsqrt -> EUP slot
    out = out * g_ref[...] + beta_ref[...]
    o_ref[...] = out.astype(o_ref.dtype)


@functools.partial(jax.jit, static_argnames=("tm", "single_buffer_weights"))
def _ffn_forward(x, w1, b1, w2, b2, gamma, beta, *, tm, single_buffer_weights):
    B, S, D = x.shape
    H = w1.shape[1]
    M = B * S

    # Lane-dense padding: feature dims to multiples of 128; rows padded so any
    # B*S works with the chosen row tile (small inputs get a small tile).
    Dp = _round_up(D, 128)
    Hp = _round_up(H, 128)
    tm_eff = max(8, min(tm, _round_up(M, 8)))
    Mp = _round_up(M, tm_eff)

    x2d = jnp.pad(x.reshape(M, D), ((0, Mp - M), (0, Dp - D)))
    w1p = jnp.pad(w1, ((0, Dp - D), (0, Hp - H))).astype(jnp.bfloat16)
    w2p = jnp.pad(w2, ((0, Hp - H), (0, Dp - D))).astype(jnp.bfloat16)
    b1p = jnp.pad(b1, (0, Hp - H)).reshape(1, Hp).astype(jnp.float32)
    b2p = jnp.pad(b2, (0, Dp - D)).reshape(1, Dp).astype(jnp.float32)
    gp = jnp.pad(gamma, (0, Dp - D)).reshape(1, Dp).astype(jnp.float32)
    bep = jnp.pad(beta, (0, Dp - D)).reshape(1, Dp).astype(jnp.float32)

    const_kwargs = {}
    if single_buffer_weights:
        # Grid-invariant operands: nothing to prefetch, so single-buffer them.
        const_kwargs["pipeline_mode"] = pl.Buffered(1)

    def const_spec(shape):
        return pl.BlockSpec(shape, lambda i: (0, 0), **const_kwargs)

    # VMEM budget: bf16 weights (x1 or x2 buffers), double-buffered x/out row
    # tiles, f32 intermediates (h, y, out), ~1.5x headroom.
    w_bytes = 2 * Dp * Hp * 2 * (1 if single_buffer_weights else 2)
    io_bytes = 2 * 2 * tm_eff * Dp * x2d.dtype.itemsize
    tmp_bytes = tm_eff * (Hp + 3 * Dp) * 4
    vmem_limit = int(1.5 * (w_bytes + io_bytes + tmp_bytes))
    vmem_limit = min(128 * 1024 * 1024, max(32 * 1024 * 1024, vmem_limit))

    kernel = functools.partial(ffn_kernel, d_valid=D, d_padded=Dp)

    out2d = pl.pallas_call(
        kernel,
        out_shape=jax.ShapeDtypeStruct((Mp, Dp), x.dtype),
        grid_spec=pltpu.PrefetchScalarGridSpec(
            num_scalar_prefetch=0,
            grid=(Mp // tm_eff,),
            in_specs=[
                pl.BlockSpec((tm_eff, Dp), lambda i: (i, 0)),  # x row tile
                const_spec((Dp, Hp)),                          # w1 (resident)
                const_spec((1, Hp)),                           # b1
                const_spec((Hp, Dp)),                          # w2 (resident)
                const_spec((1, Dp)),                           # b2
                const_spec((1, Dp)),                           # LN gamma
                const_spec((1, Dp)),                           # LN beta
            ],
            out_specs=pl.BlockSpec((tm_eff, Dp), lambda i: (i, 0)),
        ),
        compiler_params=pltpu.CompilerParams(
            dimension_semantics=("parallel",),   # row axis shards across TCs
            vmem_limit_bytes=vmem_limit,
        ),
    )(x2d, w1p, b1p, w2p, b2p, gp, bep)

    return out2d[:M, :D].reshape(B, S, D)


_SINGLE_BUFFER_OK = None   # feature-detect pl.Buffered(1) support once


def position_wise_feed_forward(x, w1, b1, w2, b2, gamma, beta, *, tm=256):
    """x: [B, S, D].  Weights follow torch.nn.Linear semantics (y = x @ W.T + b)
    but are passed here already transposed: w1 is (D, H), w2 is (H, D)."""
    global _SINGLE_BUFFER_OK
    args = (x, w1, b1, w2, b2, gamma, beta)
    if _SINGLE_BUFFER_OK is None:
        try:
            out = jax.block_until_ready(
                _ffn_forward(*args, tm=tm, single_buffer_weights=True))
            _SINGLE_BUFFER_OK = True
            return out
        except Exception:
            # pipeline_mode / Buffered(1) unsupported -> default buffering.
            _SINGLE_BUFFER_OK = False
    return _ffn_forward(*args, tm=tm, single_buffer_weights=_SINGLE_BUFFER_OK)


def reference_ffn(x, w1, b1, w2, b2, gamma, beta):
    """Pure-JAX (f32) reference matching the PyTorch forward."""
    h = jnp.maximum(x @ w1 + b1, 0.0)
    y = h @ w2 + b2
    y = y + x
    mean = jnp.mean(y, axis=-1, keepdims=True)
    var = jnp.mean((y - mean) ** 2, axis=-1, keepdims=True)
    return (y - mean) * jax.lax.rsqrt(var + LN_EPS) * gamma + beta


def _make_params(key, D, H):
    k1, kb1, k2, kb2 = jax.random.split(key, 4)
    lim1 = 1.0 / (D ** 0.5)
    lim2 = 1.0 / (H ** 0.5)
    w1 = jax.random.uniform(k1, (D, H), minval=-lim1, maxval=lim1, dtype=jnp.float32)
    b1 = jax.random.uniform(kb1, (H,), minval=-lim1, maxval=lim1, dtype=jnp.float32)
    w2 = jax.random.uniform(k2, (H, D), minval=-lim2, maxval=lim2, dtype=jnp.float32)
    b2 = jax.random.uniform(kb2, (D,), minval=-lim2, maxval=lim2, dtype=jnp.float32)
    gamma = jnp.ones((D,), dtype=jnp.float32)   # nn.LayerNorm default weight
    beta = jnp.zeros((D,), dtype=jnp.float32)   # nn.LayerNorm default bias
    return w1, b1, w2, b2, gamma, beta


def _run_case(key, B, S, D, H):
    kx, kp = jax.random.split(key)
    x = jax.random.normal(kx, (B, S, D), dtype=jnp.float32)
    params = _make_params(kp, D, H)
    out = jax.block_until_ready(position_wise_feed_forward(x, *params))
    ref = reference_ffn(x, *params)
    assert out.shape == (B, S, D)
    # bf16 MXU operands with f32 accumulation -> relaxed tolerance vs f32 ref.
    assert jnp.allclose(out, ref, atol=3e-2, rtol=3e-2), (
        f"mismatch vs reference: max abs diff "
        f"{float(jnp.max(jnp.abs(out - ref)))}")
    return out


if __name__ == "__main__":
    key = jax.random.PRNGKey(0)
    k1, k2 = jax.random.split(key)
    # Small shapes consistent with the module: x is [batch, seq, dim_model].
    _run_case(k1, B=2, S=8, D=32, H=64)
    # Row count not divisible by 8 (exercises the row-padding path).
    _run_case(k2, B=1, S=5, D=32, H=64)
    print("KERNEL_OK")
</pallas_src>

<mosaic_0001>
module attributes {stable_mosaic.version = 11 : i64} {
  func.func @ffn_kernel(%arg0: i32, %arg1: memref<16x128xf32, #tpu.memory_space<vmem>>, %arg2: memref<128x128xbf16, #tpu.memory_space<vmem>>, %arg3: memref<1x128xf32, #tpu.memory_space<vmem>>, %arg4: memref<128x128xbf16, #tpu.memory_space<vmem>>, %arg5: memref<1x128xf32, #tpu.memory_space<vmem>>, %arg6: memref<1x128xf32, #tpu.memory_space<vmem>>, %arg7: memref<1x128xf32, #tpu.memory_space<vmem>>, %arg8: memref<16x128xf32, #tpu.memory_space<vmem>>) attributes {dimension_semantics = [#tpu.dimension_semantics<parallel>], iteration_bounds = array<i64: 1>, scalar_prefetch = 0 : i64, scratch_operands = 0 : i64, tpu.core_type = #tpu.core_type<tc>, window_params = [{transform_indices = @transform_0, window_bounds = array<i64: 16, 128>}, {pipeline_mode = #tpu.pipeline_mode<synchronous>, transform_indices = @transform_1, window_bounds = array<i64: 128, 128>}, {pipeline_mode = #tpu.pipeline_mode<synchronous>, transform_indices = @transform_2, window_bounds = array<i64: 1, 128>}, {pipeline_mode = #tpu.pipeline_mode<synchronous>, transform_indices = @transform_3, window_bounds = array<i64: 128, 128>}, {pipeline_mode = #tpu.pipeline_mode<synchronous>, transform_indices = @transform_4, window_bounds = array<i64: 1, 128>}, {pipeline_mode = #tpu.pipeline_mode<synchronous>, transform_indices = @transform_5, window_bounds = array<i64: 1, 128>}, {pipeline_mode = #tpu.pipeline_mode<synchronous>, transform_indices = @transform_6, window_bounds = array<i64: 1, 128>}, {transform_indices = @transform_7, window_bounds = array<i64: 16, 128>}]} {
    %c0 = arith.constant 0 : index
    %c0_0 = arith.constant 0 : index
    %0 = vector.load %arg1[%c0, %c0_0] : memref<16x128xf32, #tpu.memory_space<vmem>>, vector<16x128xf32>
    %1 = arith.truncf %0 : vector<16x128xf32> to vector<16x128xbf16>
    %c0_1 = arith.constant 0 : index
    %c0_2 = arith.constant 0 : index
    %2 = vector.load %arg2[%c0_1, %c0_2] : memref<128x128xbf16, #tpu.memory_space<vmem>>, vector<128x128xbf16>
    %cst = arith.constant dense<0.000000e+00> : vector<16x128xf32>
    %3 = tpu.matmul %1, %2, %cst {dimension_numbers = #tpu.dot_dimension_numbers<[1], [0], [0], [1], [0, 0, 1, 1], [], []>} : vector<16x128xbf16>, vector<128x128xbf16>, vector<16x128xf32> -> vector<16x128xf32>
    %c0_3 = arith.constant 0 : index
    %c0_4 = arith.constant 0 : index
    %4 = vector.load %arg3[%c0_3, %c0_4] : memref<1x128xf32, #tpu.memory_space<vmem>>, vector<1x128xf32>
    %5 = vector.broadcast %4 : vector<1x128xf32> to vector<16x128xf32>
    %6 = arith.addf %3, %5 : vector<16x128xf32>
    %cst_5 = arith.constant 0.000000e+00 : f32
    %7 = vector.broadcast %cst_5 : f32 to vector<16x128xf32>
    %8 = arith.maximumf %6, %7 : vector<16x128xf32>
    %9 = arith.truncf %8 : vector<16x128xf32> to vector<16x128xbf16>
    %c0_6 = arith.constant 0 : index
    %c0_7 = arith.constant 0 : index
    %10 = vector.load %arg4[%c0_6, %c0_7] : memref<128x128xbf16, #tpu.memory_space<vmem>>, vector<128x128xbf16>
    %cst_8 = arith.constant dense<0.000000e+00> : vector<16x128xf32>
    %11 = tpu.matmul %9, %10, %cst_8 {dimension_numbers = #tpu.dot_dimension_numbers<[1], [0], [0], [1], [0, 0, 1, 1], [], []>} : vector<16x128xbf16>, vector<128x128xbf16>, vector<16x128xf32> -> vector<16x128xf32>
    %c0_9 = arith.constant 0 : index
    %c0_10 = arith.constant 0 : index
    %12 = vector.load %arg5[%c0_9, %c0_10] : memref<1x128xf32, #tpu.memory_space<vmem>>, vector<1x128xf32>
    %13 = vector.broadcast %12 : vector<1x128xf32> to vector<16x128xf32>
    %14 = arith.addf %11, %13 : vector<16x128xf32>
    %15 = arith.addf %14, %0 : vector<16x128xf32>
    %cst_11 = arith.constant dense<0.000000e+00> : vector<16xf32>
    %16 = vector.multi_reduction <add>, %15, %cst_11 [1] : vector<16x128xf32> to vector<16xf32>
    %17 = vector.shape_cast %16 : vector<16xf32> to vector<16x1xf32>
    %cst_12 = arith.constant 3.125000e-02 : f32
    %18 = vector.broadcast %cst_12 : f32 to vector<16x1xf32>
    %19 = arith.mulf %17, %18 : vector<16x1xf32>
    %20 = vector.broadcast %19 : vector<16x1xf32> to vector<16x128xf32>
    %21 = arith.subf %15, %20 : vector<16x128xf32>
    %22 = tpu.iota {dimensions = array<i32: 1>} : vector<16x128xi32>
    %c32_i32 = arith.constant 32 : i32
    %23 = vector.broadcast %c32_i32 : i32 to vector<16x128xi32>
    %24 = arith.cmpi slt, %22, %23 : vector<16x128xi32>
    %cst_13 = arith.constant 0.000000e+00 : f32
    %25 = vector.broadcast %cst_13 : f32 to vector<16x128xf32>
    %26 = arith.select %24, %21, %25 : vector<16x128xi1>, vector<16x128xf32>
    %27 = arith.mulf %26, %26 : vector<16x128xf32>
    %cst_14 = arith.constant dense<0.000000e+00> : vector<16xf32>
    %28 = vector.multi_reduction <add>, %27, %cst_14 [1] : vector<16x128xf32> to vector<16xf32>
    %29 = vector.shape_cast %28 : vector<16xf32> to vector<16x1xf32>
    %cst_15 = arith.constant 3.125000e-02 : f32
    %30 = vector.broadcast %cst_15 : f32 to vector<16x1xf32>
    %31 = arith.mulf %29, %30 : vector<16x1xf32>
    %cst_16 = arith.constant 9.99999974E-6 : f32
    %32 = vector.broadcast %cst_16 : f32 to vector<16x1xf32>
    %33 = arith.addf %31, %32 : vector<16x1xf32>
    %34 = math.rsqrt %33 : vector<16x1xf32>
    %35 = vector.broadcast %34 : vector<16x1xf32> to vector<16x128xf32>
    %36 = arith.mulf %26, %35 : vector<16x128xf32>
    %c0_17 = arith.constant 0 : index
    %c0_18 = arith.constant 0 : index
    %37 = vector.load %arg6[%c0_17, %c0_18] : memref<1x128xf32, #tpu.memory_space<vmem>>, vector<1x128xf32>
    %38 = vector.broadcast %37 : vector<1x128xf32> to vector<16x128xf32>
    %39 = arith.mulf %36, %38 : vector<16x128xf32>
    %c0_19 = arith.constant 0 : index
    %c0_20 = arith.constant 0 : index
    %40 = vector.load %arg7[%c0_19, %c0_20] : memref<1x128xf32, #tpu.memory_space<vmem>>, vector<1x128xf32>
    %41 = vector.broadcast %40 : vector<1x128xf32> to vector<16x128xf32>
    %42 = arith.addf %39, %41 : vector<16x128xf32>
    %c0_21 = arith.constant 0 : index
    %c0_22 = arith.constant 0 : index
    %43 = vector.load %arg8[%c0_21, %c0_22] : memref<16x128xf32, #tpu.memory_space<vmem>>, vector<16x128xf32>
    tpu.vector_store %arg8[%c0_21, %c0_22], %42 {strides = array<i32>} : memref<16x128xf32, #tpu.memory_space<vmem>>, vector<16x128xf32>,
    return
  }
  func.func @transform_0(%arg0: i32) -> (i32, i32) {
    %c0_i32 = arith.constant 0 : i32
    %c0_i32_0 = arith.constant 0 : i32
    return %arg0, %c0_i32 : i32, i32
  }
  func.func @transform_1(%arg0: i32) -> (i32, i32) {
    %c0_i32 = arith.constant 0 : i32
    %c0_i32_0 = arith.constant 0 : i32
    %c0_i32_1 = arith.constant 0 : i32
    return %c0_i32, %c0_i32_0 : i32, i32
  }
  func.func @transform_2(%arg0: i32) -> (i32, i32) {
    %c0_i32 = arith.constant 0 : i32
    %c0_i32_0 = arith.constant 0 : i32
    %c0_i32_1 = arith.constant 0 : i32
    return %c0_i32, %c0_i32_0 : i32, i32
  }
  func.func @transform_3(%arg0: i32) -> (i32, i32) {
    %c0_i32 = arith.constant 0 : i32
    %c0_i32_0 = arith.constant 0 : i32
    %c0_i32_1 = arith.constant 0 : i32
    return %c0_i32, %c0_i32_0 : i32, i32
  }
  func.func @transform_4(%arg0: i32) -> (i32, i32) {
    %c0_i32 = arith.constant 0 : i32
    %c0_i32_0 = arith.constant 0 : i32
    %c0_i32_1 = arith.constant 0 : i32
    return %c0_i32, %c0_i32_0 : i32, i32
  }
  func.func @transform_5(%arg0: i32) -> (i32, i32) {
    %c0_i32 = arith.constant 0 : i32
    %c0_i32_0 = arith.constant 0 : i32
    %c0_i32_1 = arith.constant 0 : i32
    return %c0_i32, %c0_i32_0 : i32, i32
  }
  func.func @transform_6(%arg0: i32) -> (i32, i32) {
    %c0_i32 = arith.constant 0 : i32
    %c0_i32_0 = arith.constant 0 : i32
    %c0_i32_1 = arith.constant 0 : i32
    return %c0_i32, %c0_i32_0 : i32, i32
  }
  func.func @transform_7(%arg0: i32) -> (i32, i32) {
    %c0_i32 = arith.constant 0 : i32
    %c0_i32_0 = arith.constant 0 : i32
    return %arg0, %c0_i32 : i32, i32
  }
}

module attributes {stable_mosaic.version = 11 : i64} {
  func.func @ffn_kernel(%arg0: i32, %arg1: memref<16x128xf32, #tpu.memory_space<vmem>>, %arg2: memref<128x128xbf16, #tpu.memory_space<vmem>>, %arg3: memref<1x128xf32, #tpu.memory_space<vmem>>, %arg4: memref<128x128xbf16, #tpu.memory_space<vmem>>, %arg5: memref<1x128xf32, #tpu.memory_space<vmem>>, %arg6: memref<1x128xf32, #tpu.memory_space<vmem>>, %arg7: memref<1x128xf32, #tpu.memory_space<vmem>>, %arg8: memref<16x128xf32, #tpu.memory_space<vmem>>) attributes {dimension_semantics = [#tpu.dimension_semantics<parallel>], iteration_bounds = array<i64: 1>, scalar_prefetch = 0 : i64, scratch_operands = 0 : i64, tpu.core_type = #tpu.core_type<tc>, window_params = [{transform_indices = @transform_0, window_bounds = array<i64: 16, 128>}, {pipeline_mode = #tpu.pipeline_mode<synchronous>, transform_indices = @transform_1, window_bounds = array<i64: 128, 128>}, {pipeline_mode = #tpu.pipeline_mode<synchronous>, transform_indices = @transform_2, window_bounds = array<i64: 1, 128>}, {pipeline_mode = #tpu.pipeline_mode<synchronous>, transform_indices = @transform_3, window_bounds = array<i64: 128, 128>}, {pipeline_mode = #tpu.pipeline_mode<synchronous>, transform_indices = @transform_4, window_bounds = array<i64: 1, 128>}, {pipeline_mode = #tpu.pipeline_mode<synchronous>, transform_indices = @transform_5, window_bounds = array<i64: 1, 128>}, {pipeline_mode = #tpu.pipeline_mode<synchronous>, transform_indices = @transform_6, window_bounds = array<i64: 1, 128>}, {transform_indices = @transform_7, window_bounds = array<i64: 16, 128>}]} {
    %c0 = arith.constant 0 : index
    %c0_0 = arith.constant 0 : index
    %0 = vector.load %arg1[%c0, %c0_0] : memref<16x128xf32, #tpu.memory_space<vmem>>, vector<16x128xf32>
    %1 = arith.truncf %0 : vector<16x128xf32> to vector<16x128xbf16>
    %c0_1 = arith.constant 0 : index
    %c0_2 = arith.constant 0 : index
    %2 = vector.load %arg2[%c0_1, %c0_2] : memref<128x128xbf16, #tpu.memory_space<vmem>>, vector<128x128xbf16>
    %cst = arith.constant dense<0.000000e+00> : vector<16x128xf32>
    %3 = tpu.matmul %1, %2, %cst {dimension_numbers = #tpu.dot_dimension_numbers<[1], [0], [0], [1], [0, 0, 1, 1], [], []>} : vector<16x128xbf16>, vector<128x128xbf16>, vector<16x128xf32> -> vector<16x128xf32>
    %c0_3 = arith.constant 0 : index
    %c0_4 = arith.constant 0 : index
    %4 = vector.load %arg3[%c0_3, %c0_4] : memref<1x128xf32, #tpu.memory_space<vmem>>, vector<1x128xf32>
    %5 = vector.broadcast %4 : vector<1x128xf32> to vector<16x128xf32>
    %6 = arith.addf %3, %5 : vector<16x128xf32>
    %cst_5 = arith.constant 0.000000e+00 : f32
    %7 = vector.broadcast %cst_5 : f32 to vector<16x128xf32>
    %8 = arith.maximumf %6, %7 : vector<16x128xf32>
    %9 = arith.truncf %8 : vector<16x128xf32> to vector<16x128xbf16>
    %c0_6 = arith.constant 0 : index
    %c0_7 = arith.constant 0 : index
    %10 = vector.load %arg4[%c0_6, %c0_7] : memref<128x128xbf16, #tpu.memory_space<vmem>>, vector<128x128xbf16>
    %cst_8 = arith.constant dense<0.000000e+00> : vector<16x128xf32>
    %11 = tpu.matmul %9, %10, %cst_8 {dimension_numbers = #tpu.dot_dimension_numbers<[1], [0], [0], [1], [0, 0, 1, 1], [], []>} : vector<16x128xbf16>, vector<128x128xbf16>, vector<16x128xf32> -> vector<16x128xf32>
    %c0_9 = arith.constant 0 : index
    %c0_10 = arith.constant 0 : index
    %12 = vector.load %arg5[%c0_9, %c0_10] : memref<1x128xf32, #tpu.memory_space<vmem>>, vector<1x128xf32>
    %13 = vector.broadcast %12 : vector<1x128xf32> to vector<16x128xf32>
    %14 = arith.addf %11, %13 : vector<16x128xf32>
    %15 = arith.addf %14, %0 : vector<16x128xf32>
    %cst_11 = arith.constant dense<0.000000e+00> : vector<16xf32>
    %16 = vector.multi_reduction <add>, %15, %cst_11 [1] : vector<16x128xf32> to vector<16xf32>
    %17 = vector.shape_cast %16 : vector<16xf32> to vector<16x1xf32>
    %cst_12 = arith.constant 3.125000e-02 : f32
    %18 = vector.broadcast %cst_12 : f32 to vector<16x1xf32>
    %19 = arith.mulf %17, %18 : vector<16x1xf32>
    %20 = vector.broadcast %19 : vector<16x1xf32> to vector<16x128xf32>
    %21 = arith.subf %15, %20 : vector<16x128xf32>
    %22 = tpu.iota {dimensions = array<i32: 1>} : vector<16x128xi32>
    %c32_i32 = arith.constant 32 : i32
    %23 = vector.broadcast %c32_i32 : i32 to vector<16x128xi32>
    %24 = arith.cmpi slt, %22, %23 : vector<16x128xi32>
    %cst_13 = arith.constant 0.000000e+00 : f32
    %25 = vector.broadcast %cst_13 : f32 to vector<16x128xf32>
    %26 = arith.select %24, %21, %25 : vector<16x128xi1>, vector<16x128xf32>
    %27 = arith.mulf %26, %26 : vector<16x128xf32>
    %cst_14 = arith.constant dense<0.000000e+00> : vector<16xf32>
    %28 = vector.multi_reduction <add>, %27, %cst_14 [1] : vector<16x128xf32> to vector<16xf32>
    %29 = vector.shape_cast %28 : vector<16xf32> to vector<16x1xf32>
    %cst_15 = arith.constant 3.125000e-02 : f32
    %30 = vector.broadcast %cst_15 : f32 to vector<16x1xf32>
    %31 = arith.mulf %29, %30 : vector<16x1xf32>
    %cst_16 = arith.constant 9.99999974E-6 : f32
    %32 = vector.broadcast %cst_16 : f32 to vector<16x1xf32>
    %33 = arith.addf %31, %32 : vector<16x1xf32>
    %34 = math.rsqrt %33 : vector<16x1xf32>
    %35 = vector.broadcast %34 : vector<16x1xf32> to vector<16x128xf32>
    %36 = arith.mulf %26, %35 : vector<16x128xf32>
    %c0_17 = arith.constant 0 : index
    %c0_18 = arith.constant 0 : index
    %37 = vector.load %arg6[%c0_17, %c0_18] : memref<1x128xf32, #tpu.memory_space<vmem>>, vector<1x128xf32>
    %38 = vector.broadcast %37 : vector<1x128xf32> to vector<16x128xf32>
    %39 = arith.mulf %36, %38 : vector<16x128xf32>
    %c0_19 = arith.constant 0 : index
    %c0_20 = arith.constant 0 : index
    %40 = vector.load %arg7[%c0_19, %c0_20] : memref<1x128xf32, #tpu.memory_space<vmem>>, vector<1x128xf32>
    %41 = vector.broadcast %40 : vector<1x128xf32> to vector<16x128xf32>
    %42 = arith.addf %39, %41 : vector<16x128xf32>
    %c0_21 = arith.constant 0 : index
    %c0_22 = arith.constant 0 : index
    %43 = vector.load %arg8[%c0_21, %c0_22] : memref<16x128xf32, #tpu.memory_space<vmem>>, vector<16x128xf32>
    tpu.vector_store %arg8[%c0_21, %c0_22], %42 {strides = array<i32>} : memref<16x128xf32, #tpu.memory_space<vmem>>, vector<16x128xf32>,
    return
  }
  func.func @transform_0(%arg0: i32) -> (i32, i32) {
    %c0_i32 = arith.constant 0 : i32
    %c0_i32_0 = arith.constant 0 : i32
    return %arg0, %c0_i32 : i32, i32
  }
  func.func @transform_1(%arg0: i32) -> (i32, i32) {
    %c0_i32 = arith.constant 0 : i32
    %c0_i32_0 = arith.constant 0 : i32
    %c0_i32_1 = arith.constant 0 : i32
    return %c0_i32, %c0_i32_0 : i32, i32
  }
  func.func @transform_2(%arg0: i32) -> (i32, i32) {
    %c0_i32 = arith.constant 0 : i32
    %c0_i32_0 = arith.constant 0 : i32
    %c0_i32_1 = arith.constant 0 : i32
    return %c0_i32, %c0_i32_0 : i32, i32
  }
  func.func @transform_3(%arg0: i32) -> (i32, i32) {
    %c0_i32 = arith.constant 0 : i32
    %c0_i32_0 = arith.constant 0 : i32
    %c0_i32_1 = arith.constant 0 : i32
    return %c0_i32, %c0_i32_0 : i32, i32
  }
  func.func @transform_4(%arg0: i32) -> (i32, i32) {
    %c0_i32 = arith.constant 0 : i32
    %c0_i32_0 = arith.constant 0 : i32
    %c0_i32_1 = arith.constant 0 : i32
    return %c0_i32, %c0_i32_0 : i32, i32
  }
  func.func @transform_5(%arg0: i32) -> (i32, i32) {
    %c0_i32 = arith.constant 0 : i32
    %c0_i32_0 = arith.constant 0 : i32
    %c0_i32_1 = arith.constant 0 : i32
    return %c0_i32, %c0_i32_0 : i32, i32
  }
  func.func @transform_6(%arg0: i32) -> (i32, i32) {
    %c0_i32 = arith.constant 0 : i32
    %c0_i32_0 = arith.constant 0 : i32
    %c0_i32_1 = arith.constant 0 : i32
    return %c0_i32, %c0_i32_0 : i32, i32
  }
  func.func @transform_7(%arg0: i32) -> (i32, i32) {
    %c0_i32 = arith.constant 0 : i32
    %c0_i32_0 = arith.constant 0 : i32
    return %arg0, %c0_i32 : i32, i32
  }
}

</mosaic_0001>

<llo_original>
// kernel: _ffn_forward.1
$region0: #{_ffn_forward.1}
  #allocation0 [shape = 'u32[]', space=smem, size = 0x4, offset = 0x4, fixed_abs, tag = 'smem constant byte address 0x4 - core index']
  #allocation1 [shape = 'u32[144,128]{1,0:T(1,128)}', space=vmem, size = 0x12000, scoped, tag = 'internal scratch']
  %s0 = inlined_call_operand.vmem [shape: f32[16,128], index: 0, kind: input, shape index: {}]
  %s1 = inlined_call_operand.vmem [shape: bf16[128,128], index: 1, kind: input, shape index: {}]
  %s2 = inlined_call_operand.vmem [shape: f32[1,128], index: 2, kind: input, shape index: {}]
  %s3 = inlined_call_operand.vmem [shape: bf16[128,128], index: 3, kind: input, shape index: {}]
  %s4 = inlined_call_operand.vmem [shape: f32[1,128], index: 4, kind: input, shape index: {}]
  %s5 = inlined_call_operand.vmem [shape: f32[1,128], index: 5, kind: input, shape index: {}]
  %s6 = inlined_call_operand.vmem [shape: f32[1,128], index: 6, kind: input, shape index: {}]
  %s7 = inlined_call_operand.vmem [shape: f32[16,128], index: 7, kind: output, shape index: {}]
  %s8 = sld [smem:[#allocation0]]
  $region38: #{_ffn_forward.1} parent=0
    _
  %s10 = ssub.s32 1, %s8
  %s11 = scalar_select 0, %s10, %s8
  // Predicated region
  $region2: #{_ffn_forward.1} parent=0 // pred_check
    _
  $region3: #{_ffn_forward.1} parent=0 // pred_check_branch
    %13 = sbr.rel (0) target = $region5
  $region4: #{_ffn_forward.1} parent=0 // pred_region
    _
  $region5: #{_ffn_forward.1} parent=0 // pred_fallthru
    _
  // Predicated region
  $region6: #{_ffn_forward.1} parent=0 // pred_check
    _
  $region7: #{_ffn_forward.1} parent=0 // pred_check_branch
    %15 = sbr.rel (0) target = $region9
  $region8: #{_ffn_forward.1} parent=0 // pred_region
    _
  $region9: #{_ffn_forward.1} parent=0 // pred_fallthru
    _
  // Predicated region
  $region10: #{_ffn_forward.1} parent=0 // pred_check
    _
  $region11: #{_ffn_forward.1} parent=0 // pred_check_branch
    %17 = sbr.rel (0) target = $region13
  $region12: #{_ffn_forward.1} parent=0 // pred_region
    _
  $region13: #{_ffn_forward.1} parent=0 // pred_fallthru
    _
  // Predicated region
  $region14: #{_ffn_forward.1} parent=0 // pred_check
    _
  $region15: #{_ffn_forward.1} parent=0 // pred_check_branch
    %19 = sbr.rel (0) target = $region17
  $region16: #{_ffn_forward.1} parent=0 // pred_region
    _
  $region17: #{_ffn_forward.1} parent=0 // pred_fallthru
    _
  // Predicated region
  $region18: #{_ffn_forward.1} parent=0 // pred_check
    _
  $region19: #{_ffn_forward.1} parent=0 // pred_check_branch
    %21 = sbr.rel (0) target = $region21
  $region20: #{_ffn_forward.1} parent=0 // pred_region
    _
  $region21: #{_ffn_forward.1} parent=0 // pred_fallthru
    _
  // Predicated region
  $region22: #{_ffn_forward.1} parent=0 // pred_check
    _
  $region23: #{_ffn_forward.1} parent=0 // pred_check_branch
    %23 = sbr.rel (0) target = $region25
  $region24: #{_ffn_forward.1} parent=0 // pred_region
    _
  $region25: #{_ffn_forward.1} parent=0 // pred_fallthru
    _
  // Predicated region
  $region26: #{_ffn_forward.1} parent=0 // pred_check
    _
  $region27: #{_ffn_forward.1} parent=0 // pred_check_branch
    %25 = sbr.rel (0) target = $region29
  $region28: #{_ffn_forward.1} parent=0 // pred_region
    _
  $region29: #{_ffn_forward.1} parent=0 // pred_fallthru
    _
  %v27 = vld [vmem:[%s0] sm:$0xff]
  %v28 = vld [vmem:[%s0 + $0x8] sm:$0xff]
  %v29 = vpack.c.bf16 %v28, %v27
  %v30 = vld [vmem:[%s1] sm:$0xf]
  %v31 = vld [vmem:[%s1 + $0x4] sm:$0xf]
  %v32 = vld [vmem:[%s1 + $0x8] sm:$0xf]
  %v33 = vld [vmem:[%s1 + $0xc] sm:$0xf]
  %v34 = vld [vmem:[%s1 + $0x10] sm:$0xf]
  %v35 = vld [vmem:[%s1 + $0x14] sm:$0xf]
  %v36 = vld [vmem:[%s1 + $0x18] sm:$0xf]
  %v37 = vld [vmem:[%s1 + $0x1c] sm:$0xf]
  %v38 = vld [vmem:[%s1 + $0x20] sm:$0xf]
  %v39 = vld [vmem:[%s1 + $0x24] sm:$0xf]
  %v40 = vld [vmem:[%s1 + $0x28] sm:$0xf]
  %v41 = vld [vmem:[%s1 + $0x2c] sm:$0xf]
  %v42 = vld [vmem:[%s1 + $0x30] sm:$0xf]
  %v43 = vld [vmem:[%s1 + $0x34] sm:$0xf]
  %v44 = vld [vmem:[%s1 + $0x38] sm:$0xf]
  %v45 = vld [vmem:[%s1 + $0x3c] sm:$0xf]
  %v46 = vld [vmem:[%s2] sm:$0x1]
  %v48 = vlaneseq
  %v49 = vshrl.u32 %v48, 7
  %v50 = vsub.s32 0, %v49
  %v51 = vrot.slane %v46, %v50
  %v69 = vunpack.c.l.b16 %v30
  %v70 = vunpack.c.l.b16 %v31
  %v71 = vunpack.c.l.b16 %v32
  %v72 = vunpack.c.l.b16 %v33
  %v73 = vunpack.c.l.b16 %v34
  %v74 = vunpack.c.l.b16 %v35
  %v75 = vunpack.c.l.b16 %v36
  %v76 = vunpack.c.l.b16 %v37
  %v77 = vunpack.c.l.b16 %v38
  %v78 = vunpack.c.l.b16 %v39
  %v79 = vunpack.c.l.b16 %v40
  %v80 = vunpack.c.l.b16 %v41
  %v81 = vunpack.c.l.b16 %v42
  %v82 = vunpack.c.l.b16 %v43
  %v83 = vunpack.c.l.b16 %v44
  %v84 = vunpack.c.l.b16 %v45
  %v85 = vpack.c.b16 %v70, %v69
  %v86 = vpack.c.b16 %v72, %v71
  %v87 = vpack.c.b16 %v74, %v73
  %v88 = vpack.c.b16 %v76, %v75
  %v89 = vpack.c.b16 %v78, %v77
  %v90 = vpack.c.b16 %v80, %v79
  %v91 = vpack.c.b16 %v82, %v81
  %v92 = vpack.c.b16 %v84, %v83
  %101 = vmatprep.subr.bf16.mxu0 0
  %102 = vmatpush1.bf16.msra.mxu0 %v85
  %103 = vmatprep.subr.bf16.mxu0 0
  %104 = vmatpush1.bf16.msra.mxu0 %v86
  %105 = vmatprep.subr.bf16.mxu0 0
  %106 = vmatpush1.bf16.msra.mxu0 %v87
  %107 = vmatprep.subr.bf16.mxu0 0
  %108 = vmatpush1.bf16.msra.mxu0 %v88
  %109 = vmatprep.subr.bf16.mxu0 0
  %110 = vmatpush1.bf16.msra.mxu0 %v89
  %111 = vmatprep.subr.bf16.mxu0 0
  %112 = vmatpush1.bf16.msra.mxu0 %v90
  %113 = vmatprep.subr.bf16.mxu0 0
  %114 = vmatpush1.bf16.msra.mxu0 %v91
  %115 = vmatprep.subr.bf16.mxu0 0
  %116 = vmatpush1.bf16.msra.mxu0 %v92
  %117 = vmatprep.subr.bf16.mxu0 0
  %118 = vmatpush1.bf16.msra.mxu0 0
  %119 = vmatprep.subr.bf16.mxu0 0
  %120 = vmatpush1.bf16.msra.mxu0 0
  %121 = vmatprep.subr.bf16.mxu0 0
  %122 = vmatpush1.bf16.msra.mxu0 0
  %123 = vmatprep.subr.bf16.mxu0 0
  %124 = vmatpush1.bf16.msra.mxu0 0
  %125 = vmatprep.subr.bf16.mxu0 0
  %126 = vmatpush1.bf16.msra.mxu0 0
  %127 = vmatprep.subr.bf16.mxu0 0
  %128 = vmatpush1.bf16.msra.mxu0 0
  %129 = vmatprep.subr.bf16.mxu0 0
  %130 = vmatpush1.bf16.msra.mxu0 0
  %131 = vmatprep.subr.bf16.mxu0 0
  %132 = vmatpush1.bf16.msra.mxu0 0
  %133 = vmatprep.mubr.bf16.mxu0 0
  %134 = vmatmul.mubr.bf16.gmra.mrb[0].mxu0 %v29
  %v135 = vpop.f32.mrb[0].mxu0
  %v136 = vadd.f32 %v51, %v135
  %v137 = vpop.f32.mrb[0].mxu0
  %v138 = vpop.f32.mrb[0].mxu0
  %v139 = vadd.f32 %v51, %v138
  %v140 = vpop.f32.mrb[0].mxu0
  %141 = vdwg.mxu0
  %v142 = vmax.f32 %v136, 0.0
  %v143 = vmax.f32 %v139, 0.0
  %v144 = vpack.c.bf16 %v143, %v142
  %v145 = vld [vmem:[%s3] sm:$0xf]
  %v146 = vld [vmem:[%s3 + $0x4] sm:$0xf]
  %v147 = vld [vmem:[%s3 + $0x8] sm:$0xf]
  %v148 = vld [vmem:[%s3 + $0xc] sm:$0xf]
  %v149 = vld [vmem:[%s3 + $0x10] sm:$0xf]
  %v150 = vld [vmem:[%s3 + $0x14] sm:$0xf]
  %v151 = vld [vmem:[%s3 + $0x18] sm:$0xf]
  %v152 = vld [vmem:[%s3 + $0x1c] sm:$0xf]
  %v153 = vld [vmem:[%s3 + $0x20] sm:$0xf]
  %v154 = vld [vmem:[%s3 + $0x24] sm:$0xf]
  %v155 = vld [vmem:[%s3 + $0x28] sm:$0xf]
  %v156 = vld [vmem:[%s3 + $0x2c] sm:$0xf]
  %v157 = vld [vmem:[%s3 + $0x30] sm:$0xf]
  %v158 = vld [vmem:[%s3 + $0x34] sm:$0xf]
  %v159 = vld [vmem:[%s3 + $0x38] sm:$0xf]
  %v160 = vld [vmem:[%s3 + $0x3c] sm:$0xf]
  %v161 = vld [vmem:[%s4] sm:$0x1]
  %v163 = vlaneseq
  %v164 = vshrl.u32 %v163, 7
  %v165 = vsub.s32 0, %v164
  %v166 = vrot.slane %v161, %v165
  %v184 = vunpack.c.l.b16 %v145
  %v185 = vunpack.c.l.b16 %v146
  %v186 = vunpack.c.l.b16 %v147
  %v187 = vunpack.c.l.b16 %v148
  %v188 = vunpack.c.l.b16 %v149
  %v189 = vunpack.c.l.b16 %v150
  %v190 = vunpack.c.l.b16 %v151
  %v191 = vunpack.c.l.b16 %v152
  %v192 = vunpack.c.l.b16 %v153
  %v193 = vunpack.c.l.b16 %v154
  %v194 = vunpack.c.l.b16 %v155
  %v195 = vunpack.c.l.b16 %v156
  %v196 = vunpack.c.l.b16 %v157
  %v197 = vunpack.c.l.b16 %v158
  %v198 = vunpack.c.l.b16 %v159
  %v199 = vunpack.c.l.b16 %v160
  %v200 = vpack.c.b16 %v185, %v184
  %v201 = vpack.c.b16 %v187, %v186
  %v202 = vpack.c.b16 %v189, %v188
  %v203 = vpack.c.b16 %v191, %v190
  %v204 = vpack.c.b16 %v193, %v192
  %v205 = vpack.c.b16 %v195, %v194
  %v206 = vpack.c.b16 %v197, %v196
  %v207 = vpack.c.b16 %v199, %v198
  %216 = vmatprep.subr.bf16.mxu0 0
  %217 = vmatpush1.bf16.msra.mxu0 %v200
  %218 = vmatprep.subr.bf16.mxu0 0
  %219 = vmatpush1.bf16.msra.mxu0 %v201
  %220 = vmatprep.subr.bf16.mxu0 0
  %221 = vmatpush1.bf16.msra.mxu0 %v202
  %222 = vmatprep.subr.bf16.mxu0 0
  %223 = vmatpush1.bf16.msra.mxu0 %v203
  %224 = vmatprep.subr.bf16.mxu0 0
  %225 = vmatpush1.bf16.msra.mxu0 %v204
  %226 = vmatprep.subr.bf16.mxu0 0
  %227 = vmatpush1.bf16.msra.mxu0 %v205
  %228 = vmatprep.subr.bf16.mxu0 0
  %229 = vmatpush1.bf16.msra.mxu0 %v206
  %230 = vmatprep.subr.bf16.mxu0 0
  %231 = vmatpush1.bf16.msra.mxu0 %v207
  %232 = vmatprep.subr.bf16.mxu0 0
  %233 = vmatpush1.bf16.msra.mxu0 0
  %234 = vmatprep.subr.bf16.mxu0 0
  %235 = vmatpush1.bf16.msra.mxu0 0
  %236 = vmatprep.subr.bf16.mxu0 0
  %237 = vmatpush1.bf16.msra.mxu0 0
  %238 = vmatprep.subr.bf16.mxu0 0
  %239 = vmatpush1.bf16.msra.mxu0 0
  %240 = vmatprep.subr.bf16.mxu0 0
  %241 = vmatpush1.bf16.msra.mxu0 0
  %242 = vmatprep.subr.bf16.mxu0 0
  %243 = vmatpush1.bf16.msra.mxu0 0
  %244 = vmatprep.subr.bf16.mxu0 0
  %245 = vmatpush1.bf16.msra.mxu0 0
  %246 = vmatprep.subr.bf16.mxu0 0
  %247 = vmatpush1.bf16.msra.mxu0 0
  %248 = vmatprep.mubr.bf16.mxu0 0
  %249 = vmatmul.mubr.bf16.gmra.mrb[0].mxu0 %v144
  %v250 = vpop.f32.mrb[0].mxu0
  %v251 = vadd.f32 %v166, %v250
  %v252 = vpop.f32.mrb[0].mxu0
  %v253 = vpop.f32.mrb[0].mxu0
  %v254 = vadd.f32 %v166, %v253
  %v255 = vpop.f32.mrb[0].mxu0
  %256 = vdwg.mxu0
  %v257 = vadd.f32 %v251, %v27
  %v258 = vadd.f32 %v254, %v28
  %259 = vadd.xlane.f32.xlu0 %v257
  %v260 = vpop.xlane.xlu0 %259
  %261 = vadd.xlane.f32.xlu0 %v258
  %v262 = vpop.xlane.xlu0 %261
  %v263 = vmul.f32 %v260, 0.03125
  %v264 = vmul.f32 %v262, 0.03125
  %v265 = vsub.f32 %v257, %v263
  %v266 = vsub.f32 %v258, %v264
  %v267 = vlaneseq
  %v268 = vand.u32 %v267, 127
  %vm269 = vcmp.lt.s32.totalorder %v268, 32
  %v270 = vsel %vm269, %v265, 0.0
  %v271 = vsel %vm269, %v266, 0.0
  %v272 = vmul.f32 %v270, %v270
  %v273 = vmul.f32 %v271, %v271
  %274 = vadd.xlane.f32.xlu0 %v272
  %v275 = vpop.xlane.xlu0 %274
  %276 = vadd.xlane.f32.xlu0 %v273
  %v277 = vpop.xlane.xlu0 %276
  %v278 = vmul.f32 %v275, 0.03125
  %v279 = vmul.f32 %v277, 0.03125
  %v280 = vadd.f32 %v278, 1e-05
  %v281 = vadd.f32 %v279, 1e-05
  %v282 = vrsqrt.pop %v280
  %v283 = vrsqrt.pop %v281
  %v284 = vmul.f32 %v270, %v282
  %v285 = vmul.f32 %v271, %v283
  %v286 = vld [vmem:[%s5] sm:$0x1]
  %v288 = vlaneseq
  %v289 = vshrl.u32 %v288, 7
  %v290 = vsub.s32 0, %v289
  %v291 = vrot.slane %v286, %v290
  %v293 = vmul.f32 %v284, %v291
  %v294 = vmul.f32 %v285, %v291
  %v295 = vld [vmem:[%s6] sm:$0x1]
  %v297 = vlaneseq
  %v298 = vshrl.u32 %v297, 7
  %v299 = vsub.s32 0, %v298
  %v300 = vrot.slane %v295, %v299
  %v302 = vadd.f32 %v293, %v300
  %v303 = vadd.f32 %v294, %v300
  %304 = vst [vmem:[%s7] sm:$0xff] %v302
  %305 = vst [vmem:[%s7 + $0x8] sm:$0xff] %v303
  // Predicated region
  $region30: #{_ffn_forward.1} parent=0 // pred_check
    _
  $region31: #{_ffn_forward.1} parent=0 // pred_check_branch
    %307 = sbr.rel (0) target = $region33
  $region32: #{_ffn_forward.1} parent=0 // pred_region
    _
  $region33: #{_ffn_forward.1} parent=0 // pred_fallthru
    _
  // Predicated region
  $region34: #{_ffn_forward.1} parent=0 // pred_check
    _
  $region35: #{_ffn_forward.1} parent=0 // pred_check_branch
    %309 = sbr.rel (0) target = $region37
  $region36: #{_ffn_forward.1} parent=0 // pred_region
    _
  $region37: #{_ffn_forward.1} parent=0 // pred_fallthru
    _

// kernel: _ffn_forward.1
$region0: #{_ffn_forward.1}
  #allocation0 [shape = 'u32[]', space=smem, size = 0x4, offset = 0x4, fixed_abs, tag = 'smem constant byte address 0x4 - core index']
  #allocation1 [shape = 'u32[144,128]{1,0:T(1,128)}', space=vmem, size = 0x12000, scoped, tag = 'internal scratch']
  %s0 = inlined_call_operand.vmem [shape: f32[16,128], index: 0, kind: input, shape index: {}]
  %s1 = inlined_call_operand.vmem [shape: bf16[128,128], index: 1, kind: input, shape index: {}]
  %s2 = inlined_call_operand.vmem [shape: f32[1,128], index: 2, kind: input, shape index: {}]
  %s3 = inlined_call_operand.vmem [shape: bf16[128,128], index: 3, kind: input, shape index: {}]
  %s4 = inlined_call_operand.vmem [shape: f32[1,128], index: 4, kind: input, shape index: {}]
  %s5 = inlined_call_operand.vmem [shape: f32[1,128], index: 5, kind: input, shape index: {}]
  %s6 = inlined_call_operand.vmem [shape: f32[1,128], index: 6, kind: input, shape index: {}]
  %s7 = inlined_call_operand.vmem [shape: f32[16,128], index: 7, kind: output, shape index: {}]
  %s8 = sld [smem:[#allocation0]]
  $region38: #{_ffn_forward.1} parent=0
    _
  %s10 = ssub.s32 1, %s8
  %s11 = scalar_select 0, %s10, %s8
  // Predicated region
  $region2: #{_ffn_forward.1} parent=0 // pred_check
    _
  $region3: #{_ffn_forward.1} parent=0 // pred_check_branch
    %13 = sbr.rel (0) target = $region5
  $region4: #{_ffn_forward.1} parent=0 // pred_region
    _
  $region5: #{_ffn_forward.1} parent=0 // pred_fallthru
    _
  // Predicated region
  $region6: #{_ffn_forward.1} parent=0 // pred_check
    _
  $region7: #{_ffn_forward.1} parent=0 // pred_check_branch
    %15 = sbr.rel (0) target = $region9
  $region8: #{_ffn_forward.1} parent=0 // pred_region
    _
  $region9: #{_ffn_forward.1} parent=0 // pred_fallthru
    _
  // Predicated region
  $region10: #{_ffn_forward.1} parent=0 // pred_check
    _
  $region11: #{_ffn_forward.1} parent=0 // pred_check_branch
    %17 = sbr.rel (0) target = $region13
  $region12: #{_ffn_forward.1} parent=0 // pred_region
    _
  $region13: #{_ffn_forward.1} parent=0 // pred_fallthru
    _
  // Predicated region
  $region14: #{_ffn_forward.1} parent=0 // pred_check
    _
  $region15: #{_ffn_forward.1} parent=0 // pred_check_branch
    %19 = sbr.rel (0) target = $region17
  $region16: #{_ffn_forward.1} parent=0 // pred_region
    _
  $region17: #{_ffn_forward.1} parent=0 // pred_fallthru
    _
  // Predicated region
  $region18: #{_ffn_forward.1} parent=0 // pred_check
    _
  $region19: #{_ffn_forward.1} parent=0 // pred_check_branch
    %21 = sbr.rel (0) target = $region21
  $region20: #{_ffn_forward.1} parent=0 // pred_region
    _
  $region21: #{_ffn_forward.1} parent=0 // pred_fallthru
    _
  // Predicated region
  $region22: #{_ffn_forward.1} parent=0 // pred_check
    _
  $region23: #{_ffn_forward.1} parent=0 // pred_check_branch
    %23 = sbr.rel (0) target = $region25
  $region24: #{_ffn_forward.1} parent=0 // pred_region
    _
  $region25: #{_ffn_forward.1} parent=0 // pred_fallthru
    _
  // Predicated region
  $region26: #{_ffn_forward.1} parent=0 // pred_check
    _
  $region27: #{_ffn_forward.1} parent=0 // pred_check_branch
    %25 = sbr.rel (0) target = $region29
  $region28: #{_ffn_forward.1} parent=0 // pred_region
    _
  $region29: #{_ffn_forward.1} parent=0 // pred_fallthru
    _
  %v27 = vld [vmem:[%s0] sm:$0xff]
  %v28 = vld [vmem:[%s0 + $0x8] sm:$0xff]
  %v29 = vpack.c.bf16 %v28, %v27
  %v30 = vld [vmem:[%s1] sm:$0xf]
  %v31 = vld [vmem:[%s1 + $0x4] sm:$0xf]
  %v32 = vld [vmem:[%s1 + $0x8] sm:$0xf]
  %v33 = vld [vmem:[%s1 + $0xc] sm:$0xf]
  %v34 = vld [vmem:[%s1 + $0x10] sm:$0xf]
  %v35 = vld [vmem:[%s1 + $0x14] sm:$0xf]
  %v36 = vld [vmem:[%s1 + $0x18] sm:$0xf]
  %v37 = vld [vmem:[%s1 + $0x1c] sm:$0xf]
  %v38 = vld [vmem:[%s1 + $0x20] sm:$0xf]
  %v39 = vld [vmem:[%s1 + $0x24] sm:$0xf]
  %v40 = vld [vmem:[%s1 + $0x28] sm:$0xf]
  %v41 = vld [vmem:[%s1 + $0x2c] sm:$0xf]
  %v42 = vld [vmem:[%s1 + $0x30] sm:$0xf]
  %v43 = vld [vmem:[%s1 + $0x34] sm:$0xf]
  %v44 = vld [vmem:[%s1 + $0x38] sm:$0xf]
  %v45 = vld [vmem:[%s1 + $0x3c] sm:$0xf]
  %v46 = vld [vmem:[%s2] sm:$0x1]
  %v48 = vlaneseq
  %v49 = vshrl.u32 %v48, 7
  %v50 = vsub.s32 0, %v49
  %v51 = vrot.slane %v46, %v50
  %v69 = vunpack.c.l.b16 %v30
  %v70 = vunpack.c.l.b16 %v31
  %v71 = vunpack.c.l.b16 %v32
  %v72 = vunpack.c.l.b16 %v33
  %v73 = vunpack.c.l.b16 %v34
  %v74 = vunpack.c.l.b16 %v35
  %v75 = vunpack.c.l.b16 %v36
  %v76 = vunpack.c.l.b16 %v37
  %v77 = vunpack.c.l.b16 %v38
  %v78 = vunpack.c.l.b16 %v39
  %v79 = vunpack.c.l.b16 %v40
  %v80 = vunpack.c.l.b16 %v41
  %v81 = vunpack.c.l.b16 %v42
  %v82 = vunpack.c.l.b16 %v43
  %v83 = vunpack.c.l.b16 %v44
  %v84 = vunpack.c.l.b16 %v45
  %v85 = vpack.c.b16 %v70, %v69
  %v86 = vpack.c.b16 %v72, %v71
  %v87 = vpack.c.b16 %v74, %v73
  %v88 = vpack.c.b16 %v76, %v75
  %v89 = vpack.c.b16 %v78, %v77
  %v90 = vpack.c.b16 %v80, %v79
  %v91 = vpack.c.b16 %v82, %v81
  %v92 = vpack.c.b16 %v84, %v83
  %101 = vmatprep.subr.bf16.mxu0 0
  %102 = vmatpush1.bf16.msra.mxu0 %v85
  %103 = vmatprep.subr.bf16.mxu0 0
  %104 = vmatpush1.bf16.msra.mxu0 %v86
  %105 = vmatprep.subr.bf16.mxu0 0
  %106 = vmatpush1.bf16.msra.mxu0 %v87
  %107 = vmatprep.subr.bf16.mxu0 0
  %108 = vmatpush1.bf16.msra.mxu0 %v88
  %109 = vmatprep.subr.bf16.mxu0 0
  %110 = vmatpush1.bf16.msra.mxu0 %v89
  %111 = vmatprep.subr.bf16.mxu0 0
  %112 = vmatpush1.bf16.msra.mxu0 %v90
  %113 = vmatprep.subr.bf16.mxu0 0
  %114 = vmatpush1.bf16.msra.mxu0 %v91
  %115 = vmatprep.subr.bf16.mxu0 0
  %116 = vmatpush1.bf16.msra.mxu0 %v92
  %117 = vmatprep.subr.bf16.mxu0 0
  %118 = vmatpush1.bf16.msra.mxu0 0
  %119 = vmatprep.subr.bf16.mxu0 0
  %120 = vmatpush1.bf16.msra.mxu0 0
  %121 = vmatprep.subr.bf16.mxu0 0
  %122 = vmatpush1.bf16.msra.mxu0 0
  %123 = vmatprep.subr.bf16.mxu0 0
  %124 = vmatpush1.bf16.msra.mxu0 0
  %125 = vmatprep.subr.bf16.mxu0 0
  %126 = vmatpush1.bf16.msra.mxu0 0
  %127 = vmatprep.subr.bf16.mxu0 0
  %128 = vmatpush1.bf16.msra.mxu0 0
  %129 = vmatprep.subr.bf16.mxu0 0
  %130 = vmatpush1.bf16.msra.mxu0 0
  %131 = vmatprep.subr.bf16.mxu0 0
  %132 = vmatpush1.bf16.msra.mxu0 0
  %133 = vmatprep.mubr.bf16.mxu0 0
  %134 = vmatmul.mubr.bf16.gmra.mrb[0].mxu0 %v29
  %v135 = vpop.f32.mrb[0].mxu0
  %v136 = vadd.f32 %v51, %v135
  %v137 = vpop.f32.mrb[0].mxu0
  %v138 = vpop.f32.mrb[0].mxu0
  %v139 = vadd.f32 %v51, %v138
  %v140 = vpop.f32.mrb[0].mxu0
  %141 = vdwg.mxu0
  %v142 = vmax.f32 %v136, 0.0
  %v143 = vmax.f32 %v139, 0.0
  %v144 = vpack.c.bf16 %v143, %v142
  %v145 = vld [vmem:[%s3] sm:$0xf]
  %v146 = vld [vmem:[%s3 + $0x4] sm:$0xf]
  %v147 = vld [vmem:[%s3 + $0x8] sm:$0xf]
  %v148 = vld [vmem:[%s3 + $0xc] sm:$0xf]
  %v149 = vld [vmem:[%s3 + $0x10] sm:$0xf]
  %v150 = vld [vmem:[%s3 + $0x14] sm:$0xf]
  %v151 = vld [vmem:[%s3 + $0x18] sm:$0xf]
  %v152 = vld [vmem:[%s3 + $0x1c] sm:$0xf]
  %v153 = vld [vmem:[%s3 + $0x20] sm:$0xf]
  %v154 = vld [vmem:[%s3 + $0x24] sm:$0xf]
  %v155 = vld [vmem:[%s3 + $0x28] sm:$0xf]
  %v156 = vld [vmem:[%s3 + $0x2c] sm:$0xf]
  %v157 = vld [vmem:[%s3 + $0x30] sm:$0xf]
  %v158 = vld [vmem:[%s3 + $0x34] sm:$0xf]
  %v159 = vld [vmem:[%s3 + $0x38] sm:$0xf]
  %v160 = vld [vmem:[%s3 + $0x3c] sm:$0xf]
  %v161 = vld [vmem:[%s4] sm:$0x1]
  %v163 = vlaneseq
  %v164 = vshrl.u32 %v163, 7
  %v165 = vsub.s32 0, %v164
  %v166 = vrot.slane %v161, %v165
  %v184 = vunpack.c.l.b16 %v145
  %v185 = vunpack.c.l.b16 %v146
  %v186 = vunpack.c.l.b16 %v147
  %v187 = vunpack.c.l.b16 %v148
  %v188 = vunpack.c.l.b16 %v149
  %v189 = vunpack.c.l.b16 %v150
  %v190 = vunpack.c.l.b16 %v151
  %v191 = vunpack.c.l.b16 %v152
  %v192 = vunpack.c.l.b16 %v153
  %v193 = vunpack.c.l.b16 %v154
  %v194 = vunpack.c.l.b16 %v155
  %v195 = vunpack.c.l.b16 %v156
  %v196 = vunpack.c.l.b16 %v157
  %v197 = vunpack.c.l.b16 %v158
  %v198 = vunpack.c.l.b16 %v159
  %v199 = vunpack.c.l.b16 %v160
  %v200 = vpack.c.b16 %v185, %v184
  %v201 = vpack.c.b16 %v187, %v186
  %v202 = vpack.c.b16 %v189, %v188
  %v203 = vpack.c.b16 %v191, %v190
  %v204 = vpack.c.b16 %v193, %v192
  %v205 = vpack.c.b16 %v195, %v194
  %v206 = vpack.c.b16 %v197, %v196
  %v207 = vpack.c.b16 %v199, %v198
  %216 = vmatprep.subr.bf16.mxu0 0
  %217 = vmatpush1.bf16.msra.mxu0 %v200
  %218 = vmatprep.subr.bf16.mxu0 0
  %219 = vmatpush1.bf16.msra.mxu0 %v201
  %220 = vmatprep.subr.bf16.mxu0 0
  %221 = vmatpush1.bf16.msra.mxu0 %v202
  %222 = vmatprep.subr.bf16.mxu0 0
  %223 = vmatpush1.bf16.msra.mxu0 %v203
  %224 = vmatprep.subr.bf16.mxu0 0
  %225 = vmatpush1.bf16.msra.mxu0 %v204
  %226 = vmatprep.subr.bf16.mxu0 0
  %227 = vmatpush1.bf16.msra.mxu0 %v205
  %228 = vmatprep.subr.bf16.mxu0 0
  %229 = vmatpush1.bf16.msra.mxu0 %v206
  %230 = vmatprep.subr.bf16.mxu0 0
  %231 = vmatpush1.bf16.msra.mxu0 %v207
  %232 = vmatprep.subr.bf16.mxu0 0
  %233 = vmatpush1.bf16.msra.mxu0 0
  %234 = vmatprep.subr.bf16.mxu0 0
  %235 = vmatpush1.bf16.msra.mxu0 0
  %236 = vmatprep.subr.bf16.mxu0 0
  %237 = vmatpush1.bf16.msra.mxu0 0
  %238 = vmatprep.subr.bf16.mxu0 0
  %239 = vmatpush1.bf16.msra.mxu0 0
  %240 = vmatprep.subr.bf16.mxu0 0
  %241 = vmatpush1.bf16.msra.mxu0 0
  %242 = vmatprep.subr.bf16.mxu0 0
  %243 = vmatpush1.bf16.msra.mxu0 0
  %244 = vmatprep.subr.bf16.mxu0 0
  %245 = vmatpush1.bf16.msra.mxu0 0
  %246 = vmatprep.subr.bf16.mxu0 0
  %247 = vmatpush1.bf16.msra.mxu0 0
  %248 = vmatprep.mubr.bf16.mxu0 0
  %249 = vmatmul.mubr.bf16.gmra.mrb[0].mxu0 %v144
  %v250 = vpop.f32.mrb[0].mxu0
  %v251 = vadd.f32 %v166, %v250
  %v252 = vpop.f32.mrb[0].mxu0
  %v253 = vpop.f32.mrb[0].mxu0
  %v254 = vadd.f32 %v166, %v253
  %v255 = vpop.f32.mrb[0].mxu0
  %256 = vdwg.mxu0
  %v257 = vadd.f32 %v251, %v27
  %v258 = vadd.f32 %v254, %v28
  %259 = vadd.xlane.f32.xlu0 %v257
  %v260 = vpop.xlane.xlu0 %259
  %261 = vadd.xlane.f32.xlu0 %v258
  %v262 = vpop.xlane.xlu0 %261
  %v263 = vmul.f32 %v260, 0.03125
  %v264 = vmul.f32 %v262, 0.03125
  %v265 = vsub.f32 %v257, %v263
  %v266 = vsub.f32 %v258, %v264
  %v267 = vlaneseq
  %v268 = vand.u32 %v267, 127
  %vm269 = vcmp.lt.s32.totalorder %v268, 32
  %v270 = vsel %vm269, %v265, 0.0
  %v271 = vsel %vm269, %v266, 0.0
  %v272 = vmul.f32 %v270, %v270
  %v273 = vmul.f32 %v271, %v271
  %274 = vadd.xlane.f32.xlu0 %v272
  %v275 = vpop.xlane.xlu0 %274
  %276 = vadd.xlane.f32.xlu0 %v273
  %v277 = vpop.xlane.xlu0 %276
  %v278 = vmul.f32 %v275, 0.03125
  %v279 = vmul.f32 %v277, 0.03125
  %v280 = vadd.f32 %v278, 1e-05
  %v281 = vadd.f32 %v279, 1e-05
  %v282 = vrsqrt.pop %v280
  %v283 = vrsqrt.pop %v281
  %v284 = vmul.f32 %v270, %v282
  %v285 = vmul.f32 %v271, %v283
  %v286 = vld [vmem:[%s5] sm:$0x1]
  %v288 = vlaneseq
  %v289 = vshrl.u32 %v288, 7
  %v290 = vsub.s32 0, %v289
  %v291 = vrot.slane %v286, %v290
  %v293 = vmul.f32 %v284, %v291
  %v294 = vmul.f32 %v285, %v291
  %v295 = vld [vmem:[%s6] sm:$0x1]
  %v297 = vlaneseq
  %v298 = vshrl.u32 %v297, 7
  %v299 = vsub.s32 0, %v298
  %v300 = vrot.slane %v295, %v299
  %v302 = vadd.f32 %v293, %v300
  %v303 = vadd.f32 %v294, %v300
  %304 = vst [vmem:[%s7] sm:$0xff] %v302
  %305 = vst [vmem:[%s7 + $0x8] sm:$0xff] %v303
  // Predicated region
  $region30: #{_ffn_forward.1} parent=0 // pred_check
    _
  $region31: #{_ffn_forward.1} parent=0 // pred_check_branch
    %307 = sbr.rel (0) target = $region33
  $region32: #{_ffn_forward.1} parent=0 // pred_region
    _
  $region33: #{_ffn_forward.1} parent=0 // pred_fallthru
    _
  // Predicated region
  $region34: #{_ffn_forward.1} parent=0 // pred_check
    _
  $region35: #{_ffn_forward.1} parent=0 // pred_check_branch
    %309 = sbr.rel (0) target = $region37
  $region36: #{_ffn_forward.1} parent=0 // pred_region
    _
  $region37: #{_ffn_forward.1} parent=0 // pred_fallthru
    _

</llo_original>
